<compile_context>
chip_gen: v6e
topology: v6e:2x2x1
jax: 0.10.0
libtpu: 0.0.40
codegen_flags: <defaults>
</compile_context>

<pallas_src>
import jax
import jax.numpy as jnp
from jax.experimental import pallas as pl
from jax.experimental.pallas import tpu as pltpu


def _round_up(x, m):
    return ((x + m - 1) // m) * m


def _pick_tile_m(M, cap=512):
    """Pick an M tile (multiple of 8, <= cap). Prefer exact divisors of M so
    the activations need no row padding (saves an HBM pass)."""
    if M <= cap:
        tm = _round_up(M, 8)
        return tm, tm  # (tile, padded M)
    for t in range(cap, 127, -8):       # largest divisor of M, multiple of 8
        if M % t == 0:
            return t, M
    return cap, _round_up(M, cap)        # fall back: pad M


def _patch_embed_kernel(x_ref, w_ref, b_ref, o_ref):
    # x_ref: (tm, K) activation tile; w_ref: (K, tn) weight tile; b_ref: (1, tn) bias.
    acc = jnp.dot(x_ref[...], w_ref[...], preferred_element_type=jnp.float32)
    o_ref[...] = (acc + b_ref[...]).astype(o_ref.dtype)


def patch_embedding(x, weight, bias, patch_size, *, compute_dtype=jnp.bfloat16):
    """Forward pass of PatchEmbedding.

    x:      (B, C, H, W)   NCHW, like PyTorch
    weight: (E, C, P, P)   nn.Conv2d weight layout
    bias:   (E,)
    returns (B, num_patches, E) in x.dtype
    """
    B, C, H, W = x.shape
    E = weight.shape[0]
    P = patch_size
    nh, nw = H // P, W // P
    num_patches = nh * nw
    out_dtype = x.dtype

    # --- glue: extract patches, flatten in (C, P, P) order (layout only) ---
    # TODO(synk): this rearrangement is one extra HBM pass; it could be folded
    # into the Pallas input DMA via allow_input_fusion or an in-kernel strip
    # gather, at the cost of much smaller per-step tiles.
    patches = x.reshape(B, C, nh, P, nw, P)
    patches = jnp.transpose(patches, (0, 2, 4, 1, 3, 5))
    patches = patches.reshape(B * num_patches, C * P * P)

    # conv weight (E, C, P, P) -> matmul weight (C*P*P, E)
    w_mat = jnp.transpose(weight.reshape(E, C * P * P))
    b_mat = bias.reshape(1, E).astype(jnp.float32)

    M, K = patches.shape

    # --- tiling: lane-dense output, MXU-friendly, VMEM-budgeted ---
    # K is left un-tiled and un-padded: block dim == full array dim is allowed.
    E_pad = _round_up(E, 128)                # lane-dense output (unmasked vst)
    tn = E_pad if E_pad <= 1024 else 512     # N tile: whole E when it fits
    E_pad = _round_up(E_pad, tn)
    tm, M_pad = _pick_tile_m(M)

    patches_p = patches.astype(compute_dtype)
    w_p = w_mat.astype(compute_dtype)
    if M_pad != M:
        patches_p = jnp.pad(patches_p, ((0, M_pad - M), (0, 0)))
    if E_pad != E:
        w_p = jnp.pad(w_p, ((0, 0), (0, E_pad - E)))
        b_mat = jnp.pad(b_mat, ((0, 0), (0, E_pad - E)))

    num_m = M_pad // tm
    num_e = E_pad // tn

    in_bytes = jnp.dtype(compute_dtype).itemsize
    out_bytes = jnp.dtype(out_dtype).itemsize
    # double-buffered working set: activation tile + weight tile + bias + output tile
    vmem_need = 2 * ((tm * K + K * tn) * in_bytes + tn * 4 + tm * tn * out_bytes)
    vmem_limit = int(min(48 << 20, max(vmem_need + (4 << 20), 16 << 20)))

    cost = pl.CostEstimate(
        flops=2 * M_pad * K * E_pad,
        transcendentals=0,
        bytes_accessed=(M_pad * K + K * E_pad) * in_bytes
        + E_pad * 4 + M_pad * E_pad * out_bytes,
    )

    out = pl.pallas_call(
        _patch_embed_kernel,
        out_shape=jax.ShapeDtypeStruct((M_pad, E_pad), out_dtype),
        grid_spec=pltpu.PrefetchScalarGridSpec(
            num_scalar_prefetch=0,
            # E tiles OUTER, M tiles INNER: weight/bias block index depends only
            # on j, so those tiles are not re-fetched across the inner M sweep.
            grid=(num_e, num_m),
            in_specs=[
                pl.BlockSpec((tm, K), lambda j, i: (i, 0)),
                pl.BlockSpec((K, tn), lambda j, i: (0, j)),
                pl.BlockSpec((1, tn), lambda j, i: (0, j)),
            ],
            out_specs=pl.BlockSpec((tm, tn), lambda j, i: (i, j)),
        ),
        compiler_params=pltpu.CompilerParams(
            dimension_semantics=("parallel", "parallel"),
            vmem_limit_bytes=vmem_limit,
        ),
        cost_estimate=cost,
    )(patches_p, w_p, b_mat)

    out = out[:M, :E]
    return out.reshape(B, num_patches, E)


if __name__ == "__main__":
    # Small shapes consistent with the module.
    img_size, patch_size, in_channels, embed_dim = 16, 4, 4, 32
    B = 2

    key = jax.random.PRNGKey(0)
    kx, kw, kb = jax.random.split(key, 3)
    x = jax.random.normal(kx, (B, in_channels, img_size, img_size), dtype=jnp.float32)
    weight = jax.random.normal(
        kw, (embed_dim, in_channels, patch_size, patch_size), dtype=jnp.float32
    ) * 0.02
    bias = jax.random.normal(kb, (embed_dim,), dtype=jnp.float32) * 0.02

    num_patches = (img_size // patch_size) ** 2

    # reference: lax conv, f32
    ref = jax.lax.conv_general_dilated(
        x, weight, window_strides=(patch_size, patch_size), padding="VALID",
        dimension_numbers=("NCHW", "OIHW", "NCHW"),
    ) + bias.reshape(1, embed_dim, 1, 1)
    ref = ref.reshape(B, embed_dim, -1).transpose(0, 2, 1)

    # f32 compute path (tight check)
    out_f32 = patch_embedding(x, weight, bias, patch_size, compute_dtype=jnp.float32)
    out_f32 = jax.block_until_ready(out_f32)
    assert out_f32.shape == (B, num_patches, embed_dim)
    assert jnp.allclose(out_f32, ref, atol=1e-4, rtol=1e-4)

    # default bf16 MXU path (looser check for bf16 rounding)
    out_bf16 = patch_embedding(x, weight, bias, patch_size)
    out_bf16 = jax.block_until_ready(out_bf16)
    assert out_bf16.shape == (B, num_patches, embed_dim)
    assert jnp.allclose(out_bf16, ref, atol=2e-2, rtol=2e-2)

    print("KERNEL_OK")
</pallas_src>

<mosaic_0001>
module attributes {stable_mosaic.version = 11 : i64} {
  func.func @_patch_embed_kernel(%arg0: i32, %arg1: i32, %arg2: memref<32x64xf32, #tpu.memory_space<vmem>>, %arg3: memref<64x128xf32, #tpu.memory_space<vmem>>, %arg4: memref<1x128xf32, #tpu.memory_space<vmem>>, %arg5: memref<32x128xf32, #tpu.memory_space<vmem>>) attributes {dimension_semantics = [#tpu.dimension_semantics<parallel>, #tpu.dimension_semantics<parallel>], iteration_bounds = array<i64: 1, 1>, scalar_prefetch = 0 : i64, scratch_operands = 0 : i64, tpu.core_type = #tpu.core_type<tc>, window_params = [{transform_indices = @transform_0, window_bounds = array<i64: 32, 64>}, {transform_indices = @transform_1, window_bounds = array<i64: 64, 128>}, {transform_indices = @transform_2, window_bounds = array<i64: 1, 128>}, {transform_indices = @transform_3, window_bounds = array<i64: 32, 128>}]} {
    %c0 = arith.constant 0 : index
    %c0_0 = arith.constant 0 : index
    %0 = vector.load %arg2[%c0, %c0_0] : memref<32x64xf32, #tpu.memory_space<vmem>>, vector<32x64xf32>
    %c0_1 = arith.constant 0 : index
    %c0_2 = arith.constant 0 : index
    %1 = vector.load %arg3[%c0_1, %c0_2] : memref<64x128xf32, #tpu.memory_space<vmem>>, vector<64x128xf32>
    %cst = arith.constant dense<0.000000e+00> : vector<32x128xf32>
    %2 = tpu.matmul %0, %1, %cst {dimension_numbers = #tpu.dot_dimension_numbers<[1], [0], [0], [1], [0, 0, 1, 1], [], []>} : vector<32x64xf32>, vector<64x128xf32>, vector<32x128xf32> -> vector<32x128xf32>
    %c0_3 = arith.constant 0 : index
    %c0_4 = arith.constant 0 : index
    %3 = vector.load %arg4[%c0_3, %c0_4] : memref<1x128xf32, #tpu.memory_space<vmem>>, vector<1x128xf32>
    %4 = vector.broadcast %3 : vector<1x128xf32> to vector<32x128xf32>
    %5 = arith.addf %2, %4 : vector<32x128xf32>
    %c0_5 = arith.constant 0 : index
    %c0_6 = arith.constant 0 : index
    %6 = vector.load %arg5[%c0_5, %c0_6] : memref<32x128xf32, #tpu.memory_space<vmem>>, vector<32x128xf32>
    tpu.vector_store %arg5[%c0_5, %c0_6], %5 {strides = array<i32>} : memref<32x128xf32, #tpu.memory_space<vmem>>, vector<32x128xf32>,
    return
  }
  func.func @transform_0(%arg0: i32, %arg1: i32) -> (i32, i32) {
    %c0_i32 = arith.constant 0 : i32
    %c0_i32_0 = arith.constant 0 : i32
    return %arg1, %c0_i32 : i32, i32
  }
  func.func @transform_1(%arg0: i32, %arg1: i32) -> (i32, i32) {
    %c0_i32 = arith.constant 0 : i32
    %c0_i32_0 = arith.constant 0 : i32
    return %c0_i32, %arg0 : i32, i32
  }
  func.func @transform_2(%arg0: i32, %arg1: i32) -> (i32, i32) {
    %c0_i32 = arith.constant 0 : i32
    %c0_i32_0 = arith.constant 0 : i32
    return %c0_i32, %arg0 : i32, i32
  }
  func.func @transform_3(%arg0: i32, %arg1: i32) -> (i32, i32) {
    %c0_i32 = arith.constant 0 : i32
    return %arg1, %arg0 : i32, i32
  }
}

</mosaic_0001>

<llo_original>
// kernel: tpu_custom_call.1
$region0: #{tpu_custom_call.1}
  #allocation0 [shape = 'u32[]', space=smem, size = 0x4, offset = 0x4, fixed_abs, tag = 'smem constant byte address 0x4 - core index']
  #allocation1 [shape = 'u32[144,128]{1,0:T(1,128)}', space=vmem, size = 0x12000, scoped, tag = 'internal scratch']
  %s0 = inlined_call_operand.hbm [shape: f32[32,64], index: 0, kind: input, shape index: {}]
  %s1 = inlined_call_operand.hbm [shape: f32[64,128], index: 1, kind: input, shape index: {}]
  %s2 = inlined_call_operand.vmem [shape: f32[1,128], index: 2, kind: input, shape index: {}]
  %s3 = inlined_call_operand.hbm [shape: f32[32,128], index: 3, kind: output, shape index: {}]
  %s4 = sld [smem:[#allocation0]]
  $region30: #{tpu_custom_call.1} parent=0
    _
  %s6 = ssub.s32 1, %s4
  %s7 = scalar_select 0, %s6, %s4
  $region1: #{tpu_custom_call.1} parent=0
    #allocation2 [shape = 'u8[16384]{0}', space=vmem, size = 0x4000, scoped, tag = 'input window, operand 0, single buffered']
    #allocation3 [shape = 's32[1]{0}', space=sflag, size = 0x4, scoped, tag = 'scoped memory for tpu_custom_call.1']
    #allocation4 [shape = 's32[1]{0}', space=sflag, size = 0x4, scoped, tag = 'scoped memory for tpu_custom_call.1']
    #allocation5 [shape = 'u8[32768]{0}', space=vmem, size = 0x8000, scoped, tag = 'input window, operand 1, single buffered']
    #allocation6 [shape = 's32[1]{0}', space=sflag, size = 0x4, scoped, tag = 'scoped memory for tpu_custom_call.1']
    #allocation7 [shape = 'u8[16384]{0}', space=vmem, size = 0x4000, scoped, tag = 'output window, operand 0, single buffered']
    %8 = vsyncpa [#allocation3], 0
    %9 = vsyncpa [#allocation6], 0
    %10 = vsyncpa [#allocation4], 0
    // Predicated region
    $region2: #{tpu_custom_call.1} parent=1 // pred_check
      _
    $region3: #{tpu_custom_call.1} parent=1 // pred_check_branch
      %12 = sbr.rel (0) target = $region5
    $region4: #{tpu_custom_call.1} parent=1 // pred_region
      %s14 = ssub.s32 512, 512
      %15 = vsyncadd [#allocation3], %s14
      %s16 = sshll.u32 [#allocation2], 4
      %s17 = int_to_ptr.vmem [resolvable:$true] %s16
      %22 = dma.hbm_to_vmem [thread:$0]  %s0, 512, %s17, [#allocation3], 128, 128, 8
    $region5: #{tpu_custom_call.1} parent=1 // pred_fallthru
      _
    // Predicated region
    $region6: #{tpu_custom_call.1} parent=1 // pred_check
      _
    $region7: #{tpu_custom_call.1} parent=1 // pred_check_branch
      %24 = sbr.rel (0) target = $region9
    $region8: #{tpu_custom_call.1} parent=1 // pred_region
      %s26 = ssub.s32 1024, 1024
      %27 = vsyncadd [#allocation6], %s26
      %s28 = sshll.u32 [#allocation5], 4
      %s29 = int_to_ptr.vmem [resolvable:$true] %s28
      %34 = dma.hbm_to_vmem [thread:$0]  %s1, 1024, %s29, [#allocation6], 128, 128, 8
    $region9: #{tpu_custom_call.1} parent=1 // pred_fallthru
      _
    // Predicated region
    $region10: #{tpu_custom_call.1} parent=1 // pred_check
      _
    $region11: #{tpu_custom_call.1} parent=1 // pred_check_branch
      %36 = sbr.rel (0) target = $region13
    $region12: #{tpu_custom_call.1} parent=1 // pred_region
      _
    $region13: #{tpu_custom_call.1} parent=1 // pred_fallthru
      _
    // Predicated region
    $region14: #{tpu_custom_call.1} parent=1 // pred_check
      _
    $region15: #{tpu_custom_call.1} parent=1 // pred_check_branch
      %38 = sbr.rel (0) target = $region17
    $region16: #{tpu_custom_call.1} parent=1 // pred_region
      %39 = dma.done [#allocation3], 512
    $region17: #{tpu_custom_call.1} parent=1 // pred_fallthru
      _
    // Predicated region
    $region18: #{tpu_custom_call.1} parent=1 // pred_check
      _
    $region19: #{tpu_custom_call.1} parent=1 // pred_check_branch
      %41 = sbr.rel (0) target = $region21
    $region20: #{tpu_custom_call.1} parent=1 // pred_region
      %42 = dma.done [#allocation6], 1024
    $region21: #{tpu_custom_call.1} parent=1 // pred_fallthru
      _
    %v43 = vld [vmem:[#allocation2] sm:$0xff]
    %v44 = vld [vmem:[#allocation2 + $0x8] sm:$0xff]
    %v45 = vld [vmem:[#allocation2 + $0x10] sm:$0xff]
    %v46 = vld [vmem:[#allocation2 + $0x18] sm:$0xff]
    %v47 = vld [vmem:[#allocation5] sm:$0xff]
    %v48 = vld [vmem:[#allocation5 + $0x8] sm:$0xff]
    %v49 = vld [vmem:[#allocation5 + $0x10] sm:$0xff]
    %v50 = vld [vmem:[#allocation5 + $0x18] sm:$0xff]
    %v51 = vld [vmem:[#allocation5 + $0x20] sm:$0xff]
    %v52 = vld [vmem:[#allocation5 + $0x28] sm:$0xff]
    %v53 = vld [vmem:[#allocation5 + $0x30] sm:$0xff]
    %v54 = vld [vmem:[#allocation5 + $0x38] sm:$0xff]
    %v55 = vld [vmem:[%s2] sm:$0x1]
    %v57 = vlaneseq
    %v58 = vshrl.u32 %v57, 7
    %v59 = vsub.s32 0, %v58
    %v60 = vrot.slane %v55, %v59
    %vm62 = vcmask 523264
    %v64 = vsel %vm62, %v43, 0
    %v67 = vsel %vm62, %v44, 0
    %v70 = vsel %vm62, %v45, 0
    %v73 = vsel %vm62, %v46, 0
    %75 = vmatprep.subr.mxu0 0.0
    %76 = vmatpush1.msra.mxu0 0.0
    %77 = vmatprep.subr.mxu0 0.0
    %78 = vmatpush1.msra.mxu0 0.0
    %79 = vmatprep.subr.mxu0 0.0
    %80 = vmatpush1.msra.mxu0 0.0
    %81 = vmatprep.subr.mxu0 0.0
    %82 = vmatpush1.msra.mxu0 0.0
    %83 = vmatprep.subr.mxu0 0.0
    %84 = vmatpush1.msra.mxu0 0.0
    %85 = vmatprep.subr.mxu0 0.0
    %86 = vmatpush1.msra.mxu0 0.0
    %87 = vmatprep.subr.mxu0 0.0
    %88 = vmatpush1.msra.mxu0 0.0
    %89 = vmatprep.subr.mxu0 0.0
    %90 = vmatpush1.msra.mxu0 0.0
    %91 = vmatprep.subr.mxu0 0.0
    %92 = vmatpush1.msra.mxu0 %v54
    %93 = vmatprep.subr.mxu0 0.0
    %94 = vmatpush1.msra.mxu0 %v53
    %95 = vmatprep.subr.mxu0 0.0
    %96 = vmatpush1.msra.mxu0 %v52
    %97 = vmatprep.subr.mxu0 0.0
    %98 = vmatpush1.msra.mxu0 %v51
    %99 = vmatprep.subr.mxu0 0.0
    %100 = vmatpush1.msra.mxu0 %v50
    %101 = vmatprep.subr.mxu0 0.0
    %102 = vmatpush1.msra.mxu0 %v49
    %103 = vmatprep.subr.mxu0 0.0
    %104 = vmatpush1.msra.mxu0 %v48
    %105 = vmatprep.subr.mxu0 0.0
    %106 = vmatpush1.msra.mxu0 %v47
    %107 = vmatprep.subr.mxu0 0.0
    %108 = vmatpush2.msra.mxu0 0.0
    %109 = vmatprep.subr.mxu0 0.0
    %110 = vmatpush2.msra.mxu0 0.0
    %111 = vmatprep.subr.mxu0 0.0
    %112 = vmatpush2.msra.mxu0 0.0
    %113 = vmatprep.subr.mxu0 0.0
    %114 = vmatpush2.msra.mxu0 0.0
    %115 = vmatprep.subr.mxu0 0.0
    %116 = vmatpush2.msra.mxu0 0.0
    %117 = vmatprep.subr.mxu0 0.0
    %118 = vmatpush2.msra.mxu0 0.0
    %119 = vmatprep.subr.mxu0 0.0
    %120 = vmatpush2.msra.mxu0 0.0
    %121 = vmatprep.subr.mxu0 0.0
    %122 = vmatpush2.msra.mxu0 0.0
    %123 = vmatprep.subr.mxu0 0.0
    %124 = vmatpush2.msra.mxu0 0.0
    %125 = vmatprep.subr.mxu0 0.0
    %126 = vmatpush2.msra.mxu0 0.0
    %127 = vmatprep.subr.mxu0 0.0
    %128 = vmatpush2.msra.mxu0 0.0
    %129 = vmatprep.subr.mxu0 0.0
    %130 = vmatpush2.msra.mxu0 0.0
    %131 = vmatprep.subr.mxu0 0.0
    %132 = vmatpush2.msra.mxu0 0.0
    %133 = vmatprep.subr.mxu0 0.0
    %134 = vmatpush2.msra.mxu0 0.0
    %135 = vmatprep.subr.mxu0 0.0
    %136 = vmatpush2.msra.mxu0 0.0
    %137 = vmatprep.subr.mxu0 0.0
    %138 = vmatpush2.msra.mxu0 0.0
    %139 = vmatprep.mubr.f32.mxu0 0.0
    %140 = vmatmul.mubr.f32.gmra.mxu0 %v64
    %v141 = vpop.f32.mrf.mxu0
    %v142 = vadd.f32 %v60, %v141
    %v143 = vpop.f32.mrf.mxu0
    %144 = vmatprep.mubr.f32.mxu0 0.0
    %145 = vmatmul.mubr.f32.gmra.mxu0 %v67
    %v146 = vpop.f32.mrf.mxu0
    %v147 = vadd.f32 %v60, %v146
    %v148 = vpop.f32.mrf.mxu0
    %149 = vmatprep.mubr.f32.mxu0 0.0
    %150 = vmatmul.mubr.f32.gmra.mxu0 %v70
    %v151 = vpop.f32.mrf.mxu0
    %v152 = vadd.f32 %v60, %v151
    %v153 = vpop.f32.mrf.mxu0
    %154 = vmatprep.mubr.f32.mxu0 0.0
    %155 = vmatmul.mubr.f32.gmra.mxu0 %v73
    %v156 = vpop.f32.mrf.mxu0
    %v157 = vadd.f32 %v60, %v156
    %v158 = vpop.f32.mrf.mxu0
    %159 = vdwg.mxu0
    %160 = vst [vmem:[#allocation7] sm:$0xff] %v142
    %161 = vst [vmem:[#allocation7 + $0x8] sm:$0xff] %v147
    %162 = vst [vmem:[#allocation7 + $0x10] sm:$0xff] %v152
    %163 = vst [vmem:[#allocation7 + $0x18] sm:$0xff] %v157
    // Predicated region
    $region22: #{tpu_custom_call.1} parent=1 // pred_check
      _
    $region23: #{tpu_custom_call.1} parent=1 // pred_check_branch
      %165 = sbr.rel (0) target = $region25
    $region24: #{tpu_custom_call.1} parent=1 // pred_region
      %s167 = ssub.s32 512, 512
      %168 = vsyncadd [#allocation4], %s167
      %s169 = sshll.u32 [#allocation7], 4
      %s170 = int_to_ptr.vmem [resolvable:$true] %s169
      %175 = dma.vmem_to_hbm [thread:$0]  %s170, 512, %s3, [#allocation4], 128, 128, 8
    $region25: #{tpu_custom_call.1} parent=1 // pred_fallthru
      _
    // Predicated region
    $region26: #{tpu_custom_call.1} parent=1 // pred_check
      _
    $region27: #{tpu_custom_call.1} parent=1 // pred_check_branch
      %177 = sbr.rel (0) target = $region29
    $region28: #{tpu_custom_call.1} parent=1 // pred_region
      %178 = dma.done [#allocation4], 512
    $region29: #{tpu_custom_call.1} parent=1 // pred_fallthru
      _
    %179 = vsyncpa [#allocation3], 1
    %180 = vsyncpa [#allocation6], 1
    %181 = vsyncpa [#allocation4], 1

</llo_original>
